<compile_context>
chip_gen: v6e
topology: v6e:2x2x1
jax: 0.10.0
libtpu: 0.0.40
codegen_flags: <defaults>
</compile_context>

<pallas_src>
import math
from functools import partial

import jax
import jax.numpy as jnp
from jax import lax
from jax.experimental import pallas as pl
from jax.experimental.pallas import tpu as pltpu


def _fused_conv_shuffle_kernel(x_ref, w_ref, b_ref, o_ref):
    # x_ref: (B, C_in*L)                 flattened NCL input (free reshape)
    # w_ref: (C_in*L, C_half*2*L_out)    fused Toeplitz-conv + pixel-shuffle matrix (hoisted constant)
    # b_ref: (1, C_half*2*L_out)         bias, pre-interleaved into the output column order
    # o_ref: (B, C_half*2*L_out)         flattened NCL output (free reshape to (B, C_half, 2*L_out))
    y = jnp.dot(x_ref[...], w_ref[...], preferred_element_type=jnp.float32)
    y = y + b_ref[...]
    # TODO(synk): nn.Dropout(p=0.5) training-mode RNG masking not implemented (eval-mode identity).
    o_ref[...] = jnp.maximum(y, 0.0).astype(o_ref.dtype)


def prepare_upsampling_ae_params(weight, bias, length, padding):
    """One-time (model-load) parameter prep — hoisted out of the per-call path.

    weight: (C_out, C_in, K)  PyTorch Conv1d weight
    bias:   (C_out,)
    Returns (fused_w, fused_b, C_half) where
      fused_w[ci*L + i, c*2*L_out + 2*l + j] = weight[2*c + j, ci, i - l + padding]  (0 outside taps)
      fused_b[0,        c*2*L_out + 2*l + j] = bias[2*c + j]
    i.e. zero-padding, im2col and the r=2 sub-pixel interleave are all baked into one matrix.
    """
    C_out, C_in, K = weight.shape
    assert C_out % 2 == 0, "pixel_shuffle_1d(2) requires an even channel count"
    C_half = C_out // 2
    L = length
    L_out = L + 2 * padding - K + 1

    i = jnp.arange(L)[None, :]            # input position
    l = jnp.arange(L_out)[:, None]        # conv output position
    k = i - l + padding                   # tap index; OOB taps -> zero (implicit zero padding)
    valid = (k >= 0) & (k < K)            # (L_out, L)
    kc = jnp.clip(k, 0, K - 1)
    # taps[co, ci, l, i] = weight[co, ci, i - l + padding], zero outside the kernel support.
    taps = jnp.where(valid[None, None], weight[:, :, kc], 0.0)        # (C_out, C_in, L_out, L)
    # Reorder to M[ci*L + i, c*(2*L_out) + 2*l + j] with co = 2*c + j (sub-pixel interleave).
    taps = taps.reshape(C_half, 2, C_in, L_out, L)                    # axes (c, j, ci, l, i)
    fused_w = jnp.transpose(taps, (2, 4, 0, 3, 1)).reshape(C_in * L, C_half * 2 * L_out)
    fused_b = jnp.broadcast_to(bias.reshape(C_half, 1, 2),
                               (C_half, L_out, 2)).reshape(1, C_half * 2 * L_out)
    return fused_w.astype(jnp.float32), fused_b.astype(jnp.float32), C_half


@partial(jax.jit, static_argnums=(3,))
def upsampling_ae_forward(x_ncl, fused_w, fused_b, c_half):
    """Per-call forward: free reshapes + one grid-less pallas_call."""
    B, C_in, L = x_ncl.shape
    N = fused_w.shape[1]                       # = C_half * 2 * L_out (lane-dense, 128 here)
    x2d = x_ncl.reshape(B, C_in * L)           # free metadata reshape of contiguous NCL
    out2d = pl.pallas_call(
        _fused_conv_shuffle_kernel,
        out_shape=jax.ShapeDtypeStruct((B, N), x_ncl.dtype),
        in_specs=[
            pl.BlockSpec(memory_space=pltpu.MemorySpace.VMEM),   # x2d (whole array, tiny)
            pl.BlockSpec(memory_space=pltpu.MemorySpace.VMEM),   # fused conv+shuffle weight
            pl.BlockSpec(memory_space=pltpu.MemorySpace.VMEM),   # interleaved bias row
        ],
        out_specs=pl.BlockSpec(memory_space=pltpu.MemorySpace.VMEM),
    )(x2d, fused_w, fused_b)
    return out2d.reshape(B, c_half, N // c_half)  # free reshape to final NCL (B, C_half, 2*L_out)


def _reference(x_ncl, weight, bias, padding):
    """Pure-JAX reference mirroring the PyTorch module (eval mode)."""
    y = lax.conv_general_dilated(
        x_ncl, weight, window_strides=(1,), padding=[(padding, padding)],
        dimension_numbers=("NCH", "OIH", "NCH"))
    y = y + bias[None, :, None]
    y = jnp.maximum(y, 0.0)
    B, C, Lo = y.shape
    y = y.reshape(B, C // 2, 2, Lo)
    y = jnp.transpose(y, (0, 1, 3, 2))
    return y.reshape(B, C // 2, Lo * 2)


if __name__ == "__main__":
    # Small shapes consistent with Upsampling_AE(in_ch=4, out_ch=8, size=3)
    B, in_ch, out_ch, L, size = 2, 4, 8, 16, 3
    padding = int((size - 1) / 2)

    key = jax.random.PRNGKey(0)
    kx, kw, kb = jax.random.split(key, 3)
    x = jax.random.normal(kx, (B, in_ch, L), dtype=jnp.float32)

    # Deterministic Conv1d params (PyTorch-default-style uniform init).
    bound = 1.0 / math.sqrt(in_ch * size)
    weight = jax.random.uniform(kw, (out_ch, in_ch, size), jnp.float32,
                                minval=-bound, maxval=bound)
    bias = jax.random.uniform(kb, (out_ch,), jnp.float32,
                              minval=-bound, maxval=bound)

    # One-time parameter prep (hoisted; not in the per-call path).
    fused_w, fused_b, c_half = prepare_upsampling_ae_params(weight, bias, L, padding)
    fused_w = jax.block_until_ready(fused_w)
    fused_b = jax.block_until_ready(fused_b)

    out = jax.block_until_ready(upsampling_ae_forward(x, fused_w, fused_b, c_half))

    ref = jax.block_until_ready(_reference(x, weight, bias, padding))
    assert out.shape == (B, out_ch // 2, 2 * L), out.shape
    assert jnp.allclose(out, ref, atol=1e-5, rtol=1e-5), "mismatch vs reference"

    print("KERNEL_OK")
</pallas_src>

<mosaic_0001>
module attributes {stable_mosaic.version = 11 : i64} {
  func.func @_fused_conv_shuffle_kernel(%arg0: memref<2x64xf32, #tpu.memory_space<vmem>>, %arg1: memref<64x128xf32, #tpu.memory_space<vmem>>, %arg2: memref<1x128xf32, #tpu.memory_space<vmem>>, %arg3: memref<2x128xf32, #tpu.memory_space<vmem>>) attributes {dimension_semantics = [], scalar_prefetch = 0 : i64, scratch_operands = 0 : i64, tpu.core_type = #tpu.core_type<tc>} {
    %c0 = arith.constant 0 : index
    %c0_0 = arith.constant 0 : index
    %0 = vector.load %arg0[%c0, %c0_0] : memref<2x64xf32, #tpu.memory_space<vmem>>, vector<2x64xf32>
    %c0_1 = arith.constant 0 : index
    %c0_2 = arith.constant 0 : index
    %1 = vector.load %arg1[%c0_1, %c0_2] : memref<64x128xf32, #tpu.memory_space<vmem>>, vector<64x128xf32>
    %cst = arith.constant dense<0.000000e+00> : vector<2x128xf32>
    %2 = tpu.matmul %0, %1, %cst {dimension_numbers = #tpu.dot_dimension_numbers<[1], [0], [0], [1], [0, 0, 1, 1], [], []>} : vector<2x64xf32>, vector<64x128xf32>, vector<2x128xf32> -> vector<2x128xf32>
    %c0_3 = arith.constant 0 : index
    %c0_4 = arith.constant 0 : index
    %3 = vector.load %arg2[%c0_3, %c0_4] : memref<1x128xf32, #tpu.memory_space<vmem>>, vector<1x128xf32>
    %4 = vector.broadcast %3 : vector<1x128xf32> to vector<2x128xf32>
    %5 = arith.addf %2, %4 : vector<2x128xf32>
    %cst_5 = arith.constant 0.000000e+00 : f32
    %6 = vector.broadcast %cst_5 : f32 to vector<2x128xf32>
    %7 = arith.maximumf %5, %6 : vector<2x128xf32>
    %c0_6 = arith.constant 0 : index
    %c0_7 = arith.constant 0 : index
    %8 = vector.load %arg3[%c0_6, %c0_7] : memref<2x128xf32, #tpu.memory_space<vmem>>, vector<2x128xf32>
    tpu.vector_store %arg3[%c0_6, %c0_7], %7 {strides = array<i32>} : memref<2x128xf32, #tpu.memory_space<vmem>>, vector<2x128xf32>,
    return
  }
}

</mosaic_0001>

<llo_original>
// kernel: upsampling_ae_forward.1
$region0: #{upsampling_ae_forward.1}
  #allocation0 [shape = 'u32[]', space=smem, size = 0x4, offset = 0x4, fixed_abs, tag = 'smem constant byte address 0x4 - core index']
  #allocation1 [shape = 'u32[144,128]{1,0:T(1,128)}', space=vmem, size = 0x12000, scoped, tag = 'internal scratch']
  %s0 = inlined_call_operand.vmem [shape: f32[2,64], index: 0, kind: input, shape index: {}]
  %s1 = inlined_call_operand.hbm [shape: f32[64,128], index: 1, kind: input, shape index: {}]
  %s2 = inlined_call_operand.vmem [shape: f32[1,128], index: 2, kind: input, shape index: {}]
  %s3 = inlined_call_operand.vmem [shape: f32[2,128], index: 3, kind: output, shape index: {}]
  %s4 = sld [smem:[#allocation0]]
  $region26: #{upsampling_ae_forward.1} parent=0
    _
  %s6 = ssub.s32 1, %s4
  %s7 = scalar_select 0, %s6, %s4
  $region1: #{upsampling_ae_forward.1} parent=0
    #allocation2 [shape = 'u8[32768]{0}', space=vmem, size = 0x8000, scoped, tag = 'input window, operand 1, single buffered']
    #allocation3 [shape = 's32[1]{0}', space=sflag, size = 0x4, scoped, tag = 'scoped memory for upsampling_ae_forward.1']
    %8 = vsyncpa [#allocation3], 0
    // Predicated region
    $region2: #{upsampling_ae_forward.1} parent=1 // pred_check
      _
    $region3: #{upsampling_ae_forward.1} parent=1 // pred_check_branch
      %10 = sbr.rel (0) target = $region5
    $region4: #{upsampling_ae_forward.1} parent=1 // pred_region
      _
    $region5: #{upsampling_ae_forward.1} parent=1 // pred_fallthru
      _
    // Predicated region
    $region6: #{upsampling_ae_forward.1} parent=1 // pred_check
      _
    $region7: #{upsampling_ae_forward.1} parent=1 // pred_check_branch
      %12 = sbr.rel (0) target = $region9
    $region8: #{upsampling_ae_forward.1} parent=1 // pred_region
      %s14 = ssub.s32 1024, 1024
      %15 = vsyncadd [#allocation3], %s14
      %s16 = sshll.u32 [#allocation2], 4
      %s17 = int_to_ptr.vmem [resolvable:$true] %s16
      %22 = dma.hbm_to_vmem [thread:$0]  %s1, 1024, %s17, [#allocation3], 128, 128, 8
    $region9: #{upsampling_ae_forward.1} parent=1 // pred_fallthru
      _
    // Predicated region
    $region10: #{upsampling_ae_forward.1} parent=1 // pred_check
      _
    $region11: #{upsampling_ae_forward.1} parent=1 // pred_check_branch
      %24 = sbr.rel (0) target = $region13
    $region12: #{upsampling_ae_forward.1} parent=1 // pred_region
      _
    $region13: #{upsampling_ae_forward.1} parent=1 // pred_fallthru
      _
    // Predicated region
    $region14: #{upsampling_ae_forward.1} parent=1 // pred_check
      _
    $region15: #{upsampling_ae_forward.1} parent=1 // pred_check_branch
      %26 = sbr.rel (0) target = $region17
    $region16: #{upsampling_ae_forward.1} parent=1 // pred_region
      %27 = dma.done [#allocation3], 1024
    $region17: #{upsampling_ae_forward.1} parent=1 // pred_fallthru
      _
    %v28 = vld [vmem:[%s0] sm:$0x3]
    %v29 = vld [vmem:[#allocation2] sm:$0xff]
    %v30 = vld [vmem:[#allocation2 + $0x8] sm:$0xff]
    %v31 = vld [vmem:[#allocation2 + $0x10] sm:$0xff]
    %v32 = vld [vmem:[#allocation2 + $0x18] sm:$0xff]
    %v33 = vld [vmem:[#allocation2 + $0x20] sm:$0xff]
    %v34 = vld [vmem:[#allocation2 + $0x28] sm:$0xff]
    %v35 = vld [vmem:[#allocation2 + $0x30] sm:$0xff]
    %v36 = vld [vmem:[#allocation2 + $0x38] sm:$0xff]
    %v37 = vld [vmem:[%s2] sm:$0x1]
    %v39 = vlaneseq
    %v40 = vshrl.u32 %v39, 7
    %v41 = vsub.s32 0, %v40
    %v42 = vrot.slane %v37, %v41
    %vm44 = vcmask 523264
    %v46 = vsel %vm44, %v28, 0
    %48 = vmatprep.subr.mxu0 0.0
    %49 = vmatpush1.msra.mxu0 0.0
    %50 = vmatprep.subr.mxu0 0.0
    %51 = vmatpush1.msra.mxu0 0.0
    %52 = vmatprep.subr.mxu0 0.0
    %53 = vmatpush1.msra.mxu0 0.0
    %54 = vmatprep.subr.mxu0 0.0
    %55 = vmatpush1.msra.mxu0 0.0
    %56 = vmatprep.subr.mxu0 0.0
    %57 = vmatpush1.msra.mxu0 0.0
    %58 = vmatprep.subr.mxu0 0.0
    %59 = vmatpush1.msra.mxu0 0.0
    %60 = vmatprep.subr.mxu0 0.0
    %61 = vmatpush1.msra.mxu0 0.0
    %62 = vmatprep.subr.mxu0 0.0
    %63 = vmatpush1.msra.mxu0 0.0
    %64 = vmatprep.subr.mxu0 0.0
    %65 = vmatpush1.msra.mxu0 %v36
    %66 = vmatprep.subr.mxu0 0.0
    %67 = vmatpush1.msra.mxu0 %v35
    %68 = vmatprep.subr.mxu0 0.0
    %69 = vmatpush1.msra.mxu0 %v34
    %70 = vmatprep.subr.mxu0 0.0
    %71 = vmatpush1.msra.mxu0 %v33
    %72 = vmatprep.subr.mxu0 0.0
    %73 = vmatpush1.msra.mxu0 %v32
    %74 = vmatprep.subr.mxu0 0.0
    %75 = vmatpush1.msra.mxu0 %v31
    %76 = vmatprep.subr.mxu0 0.0
    %77 = vmatpush1.msra.mxu0 %v30
    %78 = vmatprep.subr.mxu0 0.0
    %79 = vmatpush1.msra.mxu0 %v29
    %80 = vmatprep.subr.mxu0 0.0
    %81 = vmatpush2.msra.mxu0 0.0
    %82 = vmatprep.subr.mxu0 0.0
    %83 = vmatpush2.msra.mxu0 0.0
    %84 = vmatprep.subr.mxu0 0.0
    %85 = vmatpush2.msra.mxu0 0.0
    %86 = vmatprep.subr.mxu0 0.0
    %87 = vmatpush2.msra.mxu0 0.0
    %88 = vmatprep.subr.mxu0 0.0
    %89 = vmatpush2.msra.mxu0 0.0
    %90 = vmatprep.subr.mxu0 0.0
    %91 = vmatpush2.msra.mxu0 0.0
    %92 = vmatprep.subr.mxu0 0.0
    %93 = vmatpush2.msra.mxu0 0.0
    %94 = vmatprep.subr.mxu0 0.0
    %95 = vmatpush2.msra.mxu0 0.0
    %96 = vmatprep.subr.mxu0 0.0
    %97 = vmatpush2.msra.mxu0 0.0
    %98 = vmatprep.subr.mxu0 0.0
    %99 = vmatpush2.msra.mxu0 0.0
    %100 = vmatprep.subr.mxu0 0.0
    %101 = vmatpush2.msra.mxu0 0.0
    %102 = vmatprep.subr.mxu0 0.0
    %103 = vmatpush2.msra.mxu0 0.0
    %104 = vmatprep.subr.mxu0 0.0
    %105 = vmatpush2.msra.mxu0 0.0
    %106 = vmatprep.subr.mxu0 0.0
    %107 = vmatpush2.msra.mxu0 0.0
    %108 = vmatprep.subr.mxu0 0.0
    %109 = vmatpush2.msra.mxu0 0.0
    %110 = vmatprep.subr.mxu0 0.0
    %111 = vmatpush2.msra.mxu0 0.0
    %112 = vmatprep.mubr.f32.mxu0 0.0
    %113 = vmatmul.mubr.f32.gmra.mxu0 %v46
    %v114 = vpop.f32.mrf.mxu0
    %v115 = vadd.f32 %v42, %v114
    %v116 = vpop.f32.mrf.mxu0
    %117 = vdwg.mxu0
    %v118 = vmax.f32 %v115, 0.0
    %119 = vst [vmem:[%s3] sm:$0x3] %v118
    // Predicated region
    $region18: #{upsampling_ae_forward.1} parent=1 // pred_check
      _
    $region19: #{upsampling_ae_forward.1} parent=1 // pred_check_branch
      %121 = sbr.rel (0) target = $region21
    $region20: #{upsampling_ae_forward.1} parent=1 // pred_region
      _
    $region21: #{upsampling_ae_forward.1} parent=1 // pred_fallthru
      _
    // Predicated region
    $region22: #{upsampling_ae_forward.1} parent=1 // pred_check
      _
    $region23: #{upsampling_ae_forward.1} parent=1 // pred_check_branch
      %123 = sbr.rel (0) target = $region25
    $region24: #{upsampling_ae_forward.1} parent=1 // pred_region
      _
    $region25: #{upsampling_ae_forward.1} parent=1 // pred_fallthru
      _
    %124 = vsyncpa [#allocation3], 1

</llo_original>
